<compile_context>
chip_gen: v5e
topology: v5e:2x2
jax: 0.10.0
libtpu: 0.0.40
codegen_flags: <defaults>
</compile_context>

<pallas_src>
import math

import jax
import jax.numpy as jnp
from jax import lax
from jax.experimental import pallas as pl
from jax.experimental.pallas import tpu as pltpu

BETA = 2.0
_CHUNK_ROWS = 64                 # rows per fori_loop step inside a block
_MAX_BLOCK_ROWS = 1024           # 1024x1024 f32 => 24 MiB double-buffered inputs
_INPUT_BUDGET_BYTES = 12 << 20   # single-buffer budget summed over the 3 inputs


def _round_up(x, m):
    return -(-x // m) * m


def _cdiv(a, b):
    return -(-a // b)


def _choose_layout(total, last_dim):
    """Pick a zero-copy 2D view (rows, lanes) of the flattened inputs.

    Prefer a lane-dense last dim (multiple of 128) when `total` allows it;
    otherwise collapse only the leading dims (lanes = last_dim).  Both are free
    row-major reshapes — never a pad, never an HBM copy.
    """
    for lanes in (1024, 512, 256, 128):
        if total % lanes == 0:
            return total // lanes, lanes
    return total // last_dim, last_dim


def _smooth_l1(p, t, m):
    # torch.mul(target, mask), torch.mul(pred, mask) -> fold into one multiply.
    diff = (p - t) * m
    ad = jnp.abs(diff)
    # SmoothL1Loss(beta=2, reduction='none')
    return jnp.where(ad < BETA, (0.5 / BETA) * diff * diff, ad - 0.5 * BETA)


def _make_block_kernel(block_rows, lanes, n_valid_rows, ragged):
    """Multi-block kernel: reduce a (block_rows, lanes) block to a lane-dense
    (8, lanes) partial via 64-row chunks (bounded live vector state)."""
    n_chunks = block_rows // _CHUNK_ROWS

    def kernel(t_ref, p_ref, m_ref, out_ref):
        base_row = pl.program_id(0) * block_rows
        if ragged:
            # Hoisted out of the loop (JAX does not CSE iota/broadcasts).
            row_iota = lax.broadcasted_iota(jnp.int32, (_CHUNK_ROWS, lanes), 0)

        def body(c, acc):
            r0 = pl.multiple_of(c * _CHUNK_ROWS, _CHUNK_ROWS)
            t = t_ref[pl.ds(r0, _CHUNK_ROWS), :].astype(jnp.float32)
            p = p_ref[pl.ds(r0, _CHUNK_ROWS), :].astype(jnp.float32)
            m = m_ref[pl.ds(r0, _CHUNK_ROWS), :].astype(jnp.float32)
            loss = _smooth_l1(p, t, m)
            if ragged:
                # Rows past the logical array hold stale VMEM (NOT zeros):
                # mask with a select (NaN-safe) before accumulating.
                valid = (base_row + r0 + row_iota) < n_valid_rows
                loss = jnp.where(valid, loss, 0.0)
            # Layout-preserving sublane-group reduce: pure VPU adds, no XLU.
            part = jnp.sum(loss.reshape(_CHUNK_ROWS // 8, 8, lanes), axis=0)
            return acc + part

        acc = lax.fori_loop(0, n_chunks, body,
                            jnp.zeros((8, lanes), jnp.float32))
        out_ref[...] = acc  # lane-dense (8, lanes) store per block

    return kernel


def _single_block_kernel(t_ref, p_ref, m_ref, out_ref):
    """Small-input path: one grid step over the whole (rows, lanes) array."""
    t = t_ref[...].astype(jnp.float32)
    p = p_ref[...].astype(jnp.float32)
    m = m_ref[...].astype(jnp.float32)
    loss = _smooth_l1(p, t, m)
    out_ref[...] = jnp.sum(loss, axis=0, keepdims=True)


def selfsupervised_criterion(target, pred, grad_masking):
    """Pallas implementation of selfsupervised_criterion.forward."""
    assert target.shape == pred.shape == grad_masking.shape
    B = pred.shape[0]
    total = math.prod(pred.shape)
    last_dim = pred.shape[-1]

    rows, lanes = _choose_layout(total, last_dim)

    def as2d(x):
        if x.dtype == jnp.bool_:
            x = x.astype(jnp.int8)            # 1 byte/elem mask; rare edge case
        return jnp.reshape(x, (rows, lanes))  # free reshape: no pad, no cast

    t2, p2, m2 = as2d(target), as2d(pred), as2d(grad_masking)

    bytes_per_row = lanes * (t2.dtype.itemsize + p2.dtype.itemsize
                             + m2.dtype.itemsize)
    flops = 8 * total
    in_bytes = (t2.size * t2.dtype.itemsize + p2.size * p2.dtype.itemsize
                + m2.size * m2.dtype.itemsize)

    if rows >= 2 * _CHUNK_ROWS:
        # ---------- pipelined multi-block path ----------
        block_rows = max(_CHUNK_ROWS,
                         min(_MAX_BLOCK_ROWS,
                             (_INPUT_BUDGET_BYTES // bytes_per_row)
                             // _CHUNK_ROWS * _CHUNK_ROWS))
        # v7x has 2 TensorCores: keep at least 2 "parallel" grid steps.
        block_rows = min(block_rows,
                         max(_CHUNK_ROWS,
                             _round_up(_cdiv(rows, 2), _CHUNK_ROWS)))
        num_blocks = _cdiv(rows, block_rows)
        ragged = (rows % block_rows) != 0

        kernel = _make_block_kernel(block_rows, lanes, rows, ragged)
        out_shape = jax.ShapeDtypeStruct((num_blocks * 8, lanes), jnp.float32)
        in_spec = pl.BlockSpec((block_rows, lanes), lambda i: (i, 0))
        out_spec = pl.BlockSpec((8, lanes), lambda i: (i, 0))
        vmem_need = 2 * block_rows * bytes_per_row + 2 * 8 * lanes * 4
        out_bytes = num_blocks * 8 * lanes * 4
    else:
        # ---------- small single-block path ----------
        num_blocks = 1
        kernel = _single_block_kernel
        out_shape = jax.ShapeDtypeStruct((1, lanes), jnp.float32)
        in_spec = pl.BlockSpec((rows, lanes), lambda i: (0, 0))
        out_spec = pl.BlockSpec((1, lanes), lambda i: (0, 0))
        vmem_need = 2 * rows * bytes_per_row + 2 * lanes * 4
        out_bytes = lanes * 4

    # Explicit scoped-VMEM request: raises v5e's 16 MiB default, stays well
    # under v7x's 64 MiB physical VMEM.
    vmem_limit = max(32 << 20, min(56 << 20, vmem_need + (8 << 20)))

    partials = pl.pallas_call(
        kernel,
        out_shape=out_shape,
        grid=(num_blocks,),
        in_specs=[in_spec, in_spec, in_spec],
        out_specs=out_spec,
        compiler_params=pltpu.CompilerParams(
            dimension_semantics=("parallel",),   # independent blocks -> megacore
            vmem_limit_bytes=vmem_limit),
        cost_estimate=pl.CostEstimate(
            flops=flops, transcendentals=0,
            bytes_accessed=in_bytes + out_bytes),
    )(t2, p2, m2)

    # loss.sum(dim=-1).sum().div(pred.size(0)) — normalize by true batch size.
    loss = jnp.sum(partials) / jnp.float32(B)
    loss_dict = {"selfsupervised": loss}
    return loss_dict, loss


def _reference(target, pred, grad_masking):
    t = target.astype(jnp.float32) * grad_masking.astype(jnp.float32)
    p = pred.astype(jnp.float32) * grad_masking.astype(jnp.float32)
    d = p - t
    ad = jnp.abs(d)
    l = jnp.where(ad < BETA, 0.5 * d * d / BETA, ad - 0.5 * BETA)
    return jnp.sum(l) / target.shape[0]


if __name__ == "__main__":
    key = jax.random.PRNGKey(0)
    k1, k2, k3 = jax.random.split(key, 3)

    fn = jax.jit(selfsupervised_criterion)

    # Small shapes consistent with the forward signature (B, N, D).
    B, N, D = 2, 8, 32
    target = jax.random.normal(k1, (B, N, D), dtype=jnp.float32)
    pred = jax.random.normal(k2, (B, N, D), dtype=jnp.float32) * 3.0  # hit both branches
    grad_masking = (jax.random.uniform(k3, (B, N, D)) > 0.5).astype(jnp.float32)

    loss_dict, loss = fn(target, pred, grad_masking)
    loss = jax.block_until_ready(loss)
    ref = _reference(target, pred, grad_masking)
    assert jnp.allclose(loss, ref, rtol=1e-5, atol=1e-5), (loss, ref)
    assert "selfsupervised" in loss_dict

    # Also exercise the pipelined multi-block path (ragged last block + in-kernel
    # tail masking + 2-step "parallel" grid).
    B2, N2, D2 = 2, 257, 384
    t_b = jax.random.normal(k1, (B2, N2, D2), dtype=jnp.float32)
    p_b = jax.random.normal(k2, (B2, N2, D2), dtype=jnp.float32) * 3.0
    m_b = (jax.random.uniform(k3, (B2, N2, D2)) > 0.5).astype(jnp.float32)
    _, loss_b = fn(t_b, p_b, m_b)
    loss_b = jax.block_until_ready(loss_b)
    ref_b = _reference(t_b, p_b, m_b)
    assert jnp.allclose(loss_b, ref_b, rtol=1e-4, atol=1e-4), (loss_b, ref_b)

    print("KERNEL_OK")
</pallas_src>

<mosaic_0001>
module attributes {stable_mosaic.version = 11 : i64} {
  func.func @_single_block_kernel(%arg0: i32, %arg1: memref<1x512xf32, #tpu.memory_space<vmem>>, %arg2: memref<1x512xf32, #tpu.memory_space<vmem>>, %arg3: memref<1x512xf32, #tpu.memory_space<vmem>>, %arg4: memref<1x512xf32, #tpu.memory_space<vmem>>) attributes {dimension_semantics = [#tpu.dimension_semantics<parallel>], iteration_bounds = array<i64: 1>, scalar_prefetch = 0 : i64, scratch_operands = 0 : i64, tpu.core_type = #tpu.core_type<tc>, window_params = [{pipeline_mode = #tpu.pipeline_mode<synchronous>, transform_indices = @transform_0, window_bounds = array<i64: 1, 512>}, {pipeline_mode = #tpu.pipeline_mode<synchronous>, transform_indices = @transform_1, window_bounds = array<i64: 1, 512>}, {pipeline_mode = #tpu.pipeline_mode<synchronous>, transform_indices = @transform_2, window_bounds = array<i64: 1, 512>}, {pipeline_mode = #tpu.pipeline_mode<synchronous>, transform_indices = @transform_3, window_bounds = array<i64: 1, 512>}]} {
    %c0 = arith.constant 0 : index
    %c0_0 = arith.constant 0 : index
    %0 = vector.load %arg1[%c0, %c0_0] : memref<1x512xf32, #tpu.memory_space<vmem>>, vector<1x512xf32>
    %c0_1 = arith.constant 0 : index
    %c0_2 = arith.constant 0 : index
    %1 = vector.load %arg2[%c0_1, %c0_2] : memref<1x512xf32, #tpu.memory_space<vmem>>, vector<1x512xf32>
    %c0_3 = arith.constant 0 : index
    %c0_4 = arith.constant 0 : index
    %2 = vector.load %arg3[%c0_3, %c0_4] : memref<1x512xf32, #tpu.memory_space<vmem>>, vector<1x512xf32>
    %3 = arith.subf %1, %0 : vector<1x512xf32>
    %4 = arith.mulf %3, %2 : vector<1x512xf32>
    %5 = math.absf %4 : vector<1x512xf32>
    %cst = arith.constant 2.000000e+00 : f32
    %6 = vector.broadcast %cst : f32 to vector<1x512xf32>
    %7 = arith.cmpf olt, %5, %6 : vector<1x512xf32>
    %cst_5 = arith.constant 2.500000e-01 : f32
    %8 = vector.broadcast %cst_5 : f32 to vector<1x512xf32>
    %9 = arith.mulf %8, %4 : vector<1x512xf32>
    %10 = arith.mulf %9, %4 : vector<1x512xf32>
    %cst_6 = arith.constant 1.000000e+00 : f32
    %11 = vector.broadcast %cst_6 : f32 to vector<1x512xf32>
    %12 = arith.subf %5, %11 : vector<1x512xf32>
    %13 = arith.select %7, %10, %12 : vector<1x512xi1>, vector<1x512xf32>
    %cst_7 = arith.constant dense<0.000000e+00> : vector<512xf32>
    %14 = vector.multi_reduction <add>, %13, %cst_7 [0] : vector<1x512xf32> to vector<512xf32>
    %15 = vector.shape_cast %14 : vector<512xf32> to vector<1x512xf32>
    %c0_8 = arith.constant 0 : index
    %c0_9 = arith.constant 0 : index
    %16 = vector.load %arg4[%c0_8, %c0_9] : memref<1x512xf32, #tpu.memory_space<vmem>>, vector<1x512xf32>
    tpu.vector_store %arg4[%c0_8, %c0_9], %15 {strides = array<i32>} : memref<1x512xf32, #tpu.memory_space<vmem>>, vector<1x512xf32>,
    return
  }
  func.func @transform_0(%arg0: i32) -> (i32, i32) {
    %c0_i32 = arith.constant 0 : i32
    %c0_i32_0 = arith.constant 0 : i32
    %c0_i32_1 = arith.constant 0 : i32
    return %c0_i32, %c0_i32_0 : i32, i32
  }
  func.func @transform_1(%arg0: i32) -> (i32, i32) {
    %c0_i32 = arith.constant 0 : i32
    %c0_i32_0 = arith.constant 0 : i32
    %c0_i32_1 = arith.constant 0 : i32
    return %c0_i32, %c0_i32_0 : i32, i32
  }
  func.func @transform_2(%arg0: i32) -> (i32, i32) {
    %c0_i32 = arith.constant 0 : i32
    %c0_i32_0 = arith.constant 0 : i32
    %c0_i32_1 = arith.constant 0 : i32
    return %c0_i32, %c0_i32_0 : i32, i32
  }
  func.func @transform_3(%arg0: i32) -> (i32, i32) {
    %c0_i32 = arith.constant 0 : i32
    %c0_i32_0 = arith.constant 0 : i32
    %c0_i32_1 = arith.constant 0 : i32
    return %c0_i32, %c0_i32_0 : i32, i32
  }
}

</mosaic_0001>

<llo_original>
// kernel: selfsupervised_criterion.1
$region0: #{selfsupervised_criterion.1}
  #allocation0 [shape = 'u32[]', space=smem, size = 0x4, offset = 0x4, fixed_abs, tag = 'smem constant byte address 0x4 - core index']
  #allocation1 [shape = 'u32[72,128]{1,0:T(1,128)}', space=vmem, size = 0x9000, scoped, tag = 'internal scratch']
  %s0 = inlined_call_operand.vmem [shape: f32[1,512], index: 0, kind: input, shape index: {}]
  %s1 = inlined_call_operand.vmem [shape: f32[1,512], index: 1, kind: input, shape index: {}]
  %s2 = inlined_call_operand.vmem [shape: f32[1,512], index: 2, kind: input, shape index: {}]
  %s3 = inlined_call_operand.vmem [shape: f32[1,512], index: 3, kind: output, shape index: {}]
  %s4 = sld [smem:[#allocation0]]
  $region22: #{selfsupervised_criterion.1} parent=0
    _
  %s6 = ssub.s32 1, %s4
  %s7 = scalar_select 0, %s6, %s4
  // Predicated region
  $region2: #{selfsupervised_criterion.1} parent=0 // pred_check
    _
  $region3: #{selfsupervised_criterion.1} parent=0 // pred_check_branch
    %9 = sbr.rel (0) target = $region5
  $region4: #{selfsupervised_criterion.1} parent=0 // pred_region
    _
  $region5: #{selfsupervised_criterion.1} parent=0 // pred_fallthru
    _
  // Predicated region
  $region6: #{selfsupervised_criterion.1} parent=0 // pred_check
    _
  $region7: #{selfsupervised_criterion.1} parent=0 // pred_check_branch
    %11 = sbr.rel (0) target = $region9
  $region8: #{selfsupervised_criterion.1} parent=0 // pred_region
    _
  $region9: #{selfsupervised_criterion.1} parent=0 // pred_fallthru
    _
  // Predicated region
  $region10: #{selfsupervised_criterion.1} parent=0 // pred_check
    _
  $region11: #{selfsupervised_criterion.1} parent=0 // pred_check_branch
    %13 = sbr.rel (0) target = $region13
  $region12: #{selfsupervised_criterion.1} parent=0 // pred_region
    _
  $region13: #{selfsupervised_criterion.1} parent=0 // pred_fallthru
    _
  %v14 = vld [vmem:[%s0] sm:$0xf]
  %v15 = vld [vmem:[%s1] sm:$0xf]
  %v16 = vld [vmem:[%s2] sm:$0xf]
  %v17 = vsub.f32 %v15, %v14
  %v18 = vmul.f32 %v17, %v16
  %v19 = vand.u32 2147483647, %v18
  %vm20 = vcmp.lt.f32.partialorder %v19, 2.0
  %v21 = vmul.f32 %v18, 0.25
  %v22 = vmul.f32 %v21, %v18
  %v23 = vsub.f32 %v19, 1.0
  %v24 = vsel %vm20, %v22, %v23
  %v25 = vadd.f32 %v24, 0.0
  %v26 = vlaneseq
  %vm27 = vcmp.ge.s32.totalorder %v26, 0
  %vm28 = vcmp.lt.s32.totalorder %v26, 512
  %vm29 = vmand %vm27, %vm28
  %30 = vst.msk [vmem:[%s3] sm:$0xf] %vm29, %v25
  // Predicated region
  $region14: #{selfsupervised_criterion.1} parent=0 // pred_check
    _
  $region15: #{selfsupervised_criterion.1} parent=0 // pred_check_branch
    %32 = sbr.rel (0) target = $region17
  $region16: #{selfsupervised_criterion.1} parent=0 // pred_region
    _
  $region17: #{selfsupervised_criterion.1} parent=0 // pred_fallthru
    _
  // Predicated region
  $region18: #{selfsupervised_criterion.1} parent=0 // pred_check
    _
  $region19: #{selfsupervised_criterion.1} parent=0 // pred_check_branch
    %34 = sbr.rel (0) target = $region21
  $region20: #{selfsupervised_criterion.1} parent=0 // pred_region
    _
  $region21: #{selfsupervised_criterion.1} parent=0 // pred_fallthru
    _

</llo_original>
